<compile_context>
chip_gen: v7x
topology: tpu7x:2x2x1
jax: 0.10.0
libtpu: 0.0.40
codegen_flags: <defaults>
</compile_context>

<pallas_src>
import functools

import jax
import jax.numpy as jnp
from jax import lax
from jax.experimental import pallas as pl
from jax.experimental.pallas import tpu as pltpu


def res2block_kernel(x_ref, w_ref, b_ref, o_ref, *, scale, width, K, T,
                     compute_dtype):
    # x_ref : (1, C, T)                 input dtype (f32)
    # w_ref : (scale-1, width, K*width) compute dtype, im2col-fused taps
    # b_ref : (scale-1, width, 1)       f32
    # o_ref : (1, C, T)                 output dtype
    pad = K // 2

    # Split 0 passes through unchanged.
    o_ref[0, 0:width, :] = x_ref[0, 0:width, :].astype(o_ref.dtype)

    # Hoisted constant used to build the conv "same" halo in-register.
    zpad = jnp.zeros((width, pad), dtype=compute_dtype)

    sp = None  # carried Res2 state: a plain f32 value, no scratch needed
    for i in range(scale - 1):
        chunk = x_ref[0, (i + 1) * width:(i + 2) * width, :]       # (width, T)
        if i == 0:
            cur_f32 = chunk.astype(jnp.float32)
        else:
            cur_f32 = sp + chunk.astype(jnp.float32)
        cur = cur_f32.astype(compute_dtype)

        # Build the K shifted views with zero edge padding (value-level, no
        # HBM or scratch traffic), stack along sublanes -> one MXU dot with
        # contraction dim K*width per chain step.
        cur_p = jnp.concatenate([zpad, cur, zpad], axis=1)          # (width, T+2p)
        stacked = jnp.concatenate(
            [cur_p[:, k:k + T] for k in range(K)], axis=0)          # (K*width, T)

        acc = jnp.dot(w_ref[i], stacked,
                      preferred_element_type=jnp.float32) + b_ref[i]

        o_ref[0, (i + 1) * width:(i + 2) * width, :] = acc.astype(o_ref.dtype)
        if i < scale - 2:
            sp = acc  # f32 carry limits bf16 error growth along the chain


def res2block(x, weights, biases, *, kernel_size=3, scale=8,
              compute_dtype=jnp.bfloat16, out_dtype=None):
    """x: (B, C, T) f32.  weights: (scale-1, width, width, K) (PyTorch Conv1d OIK).
    biases: (scale-1, width).  Returns (B, C, T) in out_dtype (default x.dtype)."""
    B, C, T = x.shape
    assert C % scale == 0, "channels must be divisible by scale"
    K = kernel_size
    assert K % 2 == 1, "only odd kernel_size gives 'same' length (as the module)"
    width = C // scale
    out_dtype = x.dtype if out_dtype is None else out_dtype

    # Tiny parameter prep (negligible vs. activation traffic):
    # (scale-1, co, ci, K) -> (scale-1, co, K, ci) -> (scale-1, co, K*ci),
    # matching the k-major / ci-minor im2col stack order in the kernel.
    w = jnp.transpose(weights, (0, 1, 3, 2)).reshape(
        scale - 1, width, K * width).astype(compute_dtype)
    b = biases.reshape(scale - 1, width, 1).astype(jnp.float32)

    kernel = functools.partial(res2block_kernel, scale=scale, width=width,
                               K=K, T=T, compute_dtype=compute_dtype)

    # VMEM budget: double-buffered activation blocks + resident params + slack.
    blk_bytes = C * T * (jnp.dtype(x.dtype).itemsize +
                         jnp.dtype(out_dtype).itemsize)
    vmem_needed = 2 * blk_bytes + 2 * w.size * jnp.dtype(w.dtype).itemsize \
        + 2 * b.size * 4 + (4 << 20)
    vmem_limit = int(min(max(vmem_needed, 32 << 20), 100 << 20))

    return pl.pallas_call(
        kernel,
        out_shape=jax.ShapeDtypeStruct((B, C, T), out_dtype),
        grid_spec=pltpu.PrefetchScalarGridSpec(
            num_scalar_prefetch=0,
            grid=(B,),
            in_specs=[
                pl.BlockSpec((1, C, T), lambda g: (g, 0, 0)),
                pl.BlockSpec((scale - 1, width, K * width), lambda g: (0, 0, 0)),
                pl.BlockSpec((scale - 1, width, 1), lambda g: (0, 0, 0)),
            ],
            out_specs=pl.BlockSpec((1, C, T), lambda g: (g, 0, 0)),
        ),
        compiler_params=pltpu.CompilerParams(
            dimension_semantics=("parallel",),
            vmem_limit_bytes=vmem_limit),
    )(x, w, b)


def res2block_ref(x, weights, biases, *, kernel_size=3, scale=8):
    """Pure-JAX f32 reference mirroring the PyTorch forward (via lax conv)."""
    C = x.shape[1]
    width = C // scale
    spx = [x[:, g * width:(g + 1) * width, :] for g in range(scale)]
    outs = [spx[0]]
    sp = None
    for i in range(scale - 1):
        sp = spx[i + 1] if i == 0 else sp + spx[i + 1]
        sp = lax.conv_general_dilated(
            sp, weights[i],
            window_strides=(1,),
            padding=[(kernel_size // 2, kernel_size // 2)],
            dimension_numbers=("NCH", "OIH", "NCH"),
        ) + biases[i][None, :, None]
        outs.append(sp)
    return jnp.concatenate(outs, axis=1)


if __name__ == "__main__":
    # Small shapes consistent with the module: channels divisible by scale=8,
    # width a multiple of 8 (sublane-aligned), T deliberately not a multiple of
    # 128 so the unpadded lane-dim path is exercised, B=2 so the parallel batch
    # grid has >=2 steps.
    B, C, T = 2, 64, 40
    scale, K = 8, 3
    width = C // scale

    key = jax.random.PRNGKey(0)
    kx, kw, kb = jax.random.split(key, 3)
    x = jax.random.normal(kx, (B, C, T), dtype=jnp.float32)
    # Deterministic synthetic Conv1d parameters (PyTorch layout: (out, in, K)).
    weights = 0.1 * jax.random.normal(kw, (scale - 1, width, width, K),
                                      dtype=jnp.float32)
    biases = 0.05 * jax.random.normal(kb, (scale - 1, width), dtype=jnp.float32)

    y_ref = res2block_ref(x, weights, biases, kernel_size=K, scale=scale)

    # 1) f32 compute path: tight check against the f32 lax.conv reference.
    y32 = jax.block_until_ready(
        res2block(x, weights, biases, kernel_size=K, scale=scale,
                  compute_dtype=jnp.float32))
    assert y32.shape == (B, C, T)
    assert jnp.allclose(y32, y_ref, atol=1e-4, rtol=1e-4), \
        f"f32 path max abs err {jnp.max(jnp.abs(y32 - y_ref))}"

    # 2) default mixed-precision path (bf16 MXU operands, f32 accumulation /
    #    f32 sp carry): loose tolerance for bf16 rounding over the 7-step chain.
    ybf = jax.block_until_ready(
        res2block(x, weights, biases, kernel_size=K, scale=scale))
    assert ybf.shape == (B, C, T)
    assert jnp.allclose(ybf, y_ref, atol=1e-1, rtol=1e-1), \
        f"bf16 path max abs err {jnp.max(jnp.abs(ybf - y_ref))}"

    print("KERNEL_OK")
</pallas_src>

<mosaic_0001>
module attributes {stable_mosaic.version = 11 : i64} {
  func.func @res2block_kernel(%arg0: i32, %arg1: memref<1x64x40xf32, #tpu.memory_space<vmem>>, %arg2: memref<7x8x24xf32, #tpu.memory_space<vmem>>, %arg3: memref<7x8x1xf32, #tpu.memory_space<vmem>>, %arg4: memref<1x64x40xf32, #tpu.memory_space<vmem>>) attributes {dimension_semantics = [#tpu.dimension_semantics<parallel>], iteration_bounds = array<i64: 2>, scalar_prefetch = 0 : i64, scratch_operands = 0 : i64, tpu.core_type = #tpu.core_type<tc>, window_params = [{transform_indices = @transform_0, window_bounds = array<i64: 1, 64, 40>}, {pipeline_mode = #tpu.pipeline_mode<synchronous>, transform_indices = @transform_1, window_bounds = array<i64: 7, 8, 24>}, {pipeline_mode = #tpu.pipeline_mode<synchronous>, transform_indices = @transform_2, window_bounds = array<i64: 7, 8, 1>}, {transform_indices = @transform_3, window_bounds = array<i64: 1, 64, 40>}]} {
    %c0 = arith.constant 0 : index
    %c0_0 = arith.constant 0 : index
    %c0_1 = arith.constant 0 : index
    %0 = vector.load %arg1[%c0, %c0_0, %c0_1] : memref<1x64x40xf32, #tpu.memory_space<vmem>>, vector<1x8x40xf32>
    %1 = vector.shape_cast %0 : vector<1x8x40xf32> to vector<8x40xf32>
    %c0_2 = arith.constant 0 : index
    %c0_3 = arith.constant 0 : index
    %c0_4 = arith.constant 0 : index
    %2 = vector.load %arg4[%c0_2, %c0_3, %c0_4] : memref<1x64x40xf32, #tpu.memory_space<vmem>>, vector<1x8x40xf32>
    %3 = vector.shape_cast %2 : vector<1x8x40xf32> to vector<8x40xf32>
    %4 = vector.shape_cast %1 : vector<8x40xf32> to vector<1x8x40xf32>
    tpu.vector_store %arg4[%c0_2, %c0_3, %c0_4], %4 {strides = array<i32>} : memref<1x64x40xf32, #tpu.memory_space<vmem>>, vector<1x8x40xf32>,
    %cst = arith.constant 0.000000e+00 : f32
    %5 = vector.broadcast %cst : f32 to vector<8x1xf32>
    %c0_5 = arith.constant 0 : index
    %c8 = arith.constant 8 : index
    %c0_6 = arith.constant 0 : index
    %6 = vector.load %arg1[%c0_5, %c8, %c0_6] : memref<1x64x40xf32, #tpu.memory_space<vmem>>, vector<1x8x40xf32>
    %7 = vector.shape_cast %6 : vector<1x8x40xf32> to vector<8x40xf32>
    %8 = tpu.concatenate %5, %7, %5 in 1 : vector<8x1xf32>, vector<8x40xf32>, vector<8x1xf32> -> vector<8x42xf32>
    %9 = vector.extract_strided_slice %8 {offsets = [0, 0], sizes = [8, 40], strides = [1, 1]} : vector<8x42xf32> to vector<8x40xf32>
    %10 = vector.extract_strided_slice %8 {offsets = [0, 1], sizes = [8, 40], strides = [1, 1]} : vector<8x42xf32> to vector<8x40xf32>
    %11 = vector.extract_strided_slice %8 {offsets = [0, 2], sizes = [8, 40], strides = [1, 1]} : vector<8x42xf32> to vector<8x40xf32>
    %12 = tpu.concatenate %9, %10, %11 in 0 : vector<8x40xf32>, vector<8x40xf32>, vector<8x40xf32> -> vector<24x40xf32>
    %c0_7 = arith.constant 0 : index
    %c0_8 = arith.constant 0 : index
    %c0_9 = arith.constant 0 : index
    %13 = vector.load %arg2[%c0_7, %c0_8, %c0_9] : memref<7x8x24xf32, #tpu.memory_space<vmem>>, vector<1x8x24xf32>
    %14 = vector.shape_cast %13 : vector<1x8x24xf32> to vector<8x24xf32>
    %cst_10 = arith.constant dense<0.000000e+00> : vector<8x40xf32>
    %15 = tpu.matmul %14, %12, %cst_10 {dimension_numbers = #tpu.dot_dimension_numbers<[1], [0], [0], [1], [0, 0, 1, 1], [], []>} : vector<8x24xf32>, vector<24x40xf32>, vector<8x40xf32> -> vector<8x40xf32>
    %c0_11 = arith.constant 0 : index
    %c0_12 = arith.constant 0 : index
    %c0_13 = arith.constant 0 : index
    %16 = vector.load %arg3[%c0_11, %c0_12, %c0_13] : memref<7x8x1xf32, #tpu.memory_space<vmem>>, vector<1x8x1xf32>
    %17 = vector.shape_cast %16 : vector<1x8x1xf32> to vector<8x1xf32>
    %18 = vector.broadcast %17 : vector<8x1xf32> to vector<8x40xf32>
    %19 = arith.addf %15, %18 : vector<8x40xf32>
    %c0_14 = arith.constant 0 : index
    %c8_15 = arith.constant 8 : index
    %c0_16 = arith.constant 0 : index
    %20 = vector.load %arg4[%c0_14, %c8_15, %c0_16] : memref<1x64x40xf32, #tpu.memory_space<vmem>>, vector<1x8x40xf32>
    %21 = vector.shape_cast %20 : vector<1x8x40xf32> to vector<8x40xf32>
    %22 = vector.shape_cast %19 : vector<8x40xf32> to vector<1x8x40xf32>
    tpu.vector_store %arg4[%c0_14, %c8_15, %c0_16], %22 {strides = array<i32>} : memref<1x64x40xf32, #tpu.memory_space<vmem>>, vector<1x8x40xf32>,
    %c0_17 = arith.constant 0 : index
    %c16 = arith.constant 16 : index
    %c0_18 = arith.constant 0 : index
    %23 = vector.load %arg1[%c0_17, %c16, %c0_18] : memref<1x64x40xf32, #tpu.memory_space<vmem>>, vector<1x8x40xf32>
    %24 = vector.shape_cast %23 : vector<1x8x40xf32> to vector<8x40xf32>
    %25 = arith.addf %19, %24 : vector<8x40xf32>
    %26 = tpu.concatenate %5, %25, %5 in 1 : vector<8x1xf32>, vector<8x40xf32>, vector<8x1xf32> -> vector<8x42xf32>
    %27 = vector.extract_strided_slice %26 {offsets = [0, 0], sizes = [8, 40], strides = [1, 1]} : vector<8x42xf32> to vector<8x40xf32>
    %28 = vector.extract_strided_slice %26 {offsets = [0, 1], sizes = [8, 40], strides = [1, 1]} : vector<8x42xf32> to vector<8x40xf32>
    %29 = vector.extract_strided_slice %26 {offsets = [0, 2], sizes = [8, 40], strides = [1, 1]} : vector<8x42xf32> to vector<8x40xf32>
    %30 = tpu.concatenate %27, %28, %29 in 0 : vector<8x40xf32>, vector<8x40xf32>, vector<8x40xf32> -> vector<24x40xf32>
    %c1 = arith.constant 1 : index
    %c0_19 = arith.constant 0 : index
    %c0_20 = arith.constant 0 : index
    %31 = vector.load %arg2[%c1, %c0_19, %c0_20] : memref<7x8x24xf32, #tpu.memory_space<vmem>>, vector<1x8x24xf32>
    %32 = vector.shape_cast %31 : vector<1x8x24xf32> to vector<8x24xf32>
    %cst_21 = arith.constant dense<0.000000e+00> : vector<8x40xf32>
    %33 = tpu.matmul %32, %30, %cst_21 {dimension_numbers = #tpu.dot_dimension_numbers<[1], [0], [0], [1], [0, 0, 1, 1], [], []>} : vector<8x24xf32>, vector<24x40xf32>, vector<8x40xf32> -> vector<8x40xf32>
    %c1_22 = arith.constant 1 : index
    %c0_23 = arith.constant 0 : index
    %c0_24 = arith.constant 0 : index
    %34 = vector.load %arg3[%c1_22, %c0_23, %c0_24] : memref<7x8x1xf32, #tpu.memory_space<vmem>>, vector<1x8x1xf32>
    %35 = vector.shape_cast %34 : vector<1x8x1xf32> to vector<8x1xf32>
    %36 = vector.broadcast %35 : vector<8x1xf32> to vector<8x40xf32>
    %37 = arith.addf %33, %36 : vector<8x40xf32>
    %c0_25 = arith.constant 0 : index
    %c16_26 = arith.constant 16 : index
    %c0_27 = arith.constant 0 : index
    %38 = vector.load %arg4[%c0_25, %c16_26, %c0_27] : memref<1x64x40xf32, #tpu.memory_space<vmem>>, vector<1x8x40xf32>
    %39 = vector.shape_cast %38 : vector<1x8x40xf32> to vector<8x40xf32>
    %40 = vector.shape_cast %37 : vector<8x40xf32> to vector<1x8x40xf32>
    tpu.vector_store %arg4[%c0_25, %c16_26, %c0_27], %40 {strides = array<i32>} : memref<1x64x40xf32, #tpu.memory_space<vmem>>, vector<1x8x40xf32>,
    %c0_28 = arith.constant 0 : index
    %c24 = arith.constant 24 : index
    %c0_29 = arith.constant 0 : index
    %41 = vector.load %arg1[%c0_28, %c24, %c0_29] : memref<1x64x40xf32, #tpu.memory_space<vmem>>, vector<1x8x40xf32>
    %42 = vector.shape_cast %41 : vector<1x8x40xf32> to vector<8x40xf32>
    %43 = arith.addf %37, %42 : vector<8x40xf32>
    %44 = tpu.concatenate %5, %43, %5 in 1 : vector<8x1xf32>, vector<8x40xf32>, vector<8x1xf32> -> vector<8x42xf32>
    %45 = vector.extract_strided_slice %44 {offsets = [0, 0], sizes = [8, 40], strides = [1, 1]} : vector<8x42xf32> to vector<8x40xf32>
    %46 = vector.extract_strided_slice %44 {offsets = [0, 1], sizes = [8, 40], strides = [1, 1]} : vector<8x42xf32> to vector<8x40xf32>
    %47 = vector.extract_strided_slice %44 {offsets = [0, 2], sizes = [8, 40], strides = [1, 1]} : vector<8x42xf32> to vector<8x40xf32>
    %48 = tpu.concatenate %45, %46, %47 in 0 : vector<8x40xf32>, vector<8x40xf32>, vector<8x40xf32> -> vector<24x40xf32>
    %c2 = arith.constant 2 : index
    %c0_30 = arith.constant 0 : index
    %c0_31 = arith.constant 0 : index
    %49 = vector.load %arg2[%c2, %c0_30, %c0_31] : memref<7x8x24xf32, #tpu.memory_space<vmem>>, vector<1x8x24xf32>
    %50 = vector.shape_cast %49 : vector<1x8x24xf32> to vector<8x24xf32>
    %cst_32 = arith.constant dense<0.000000e+00> : vector<8x40xf32>
    %51 = tpu.matmul %50, %48, %cst_32 {dimension_numbers = #tpu.dot_dimension_numbers<[1], [0], [0], [1], [0, 0, 1, 1], [], []>} : vector<8x24xf32>, vector<24x40xf32>, vector<8x40xf32> -> vector<8x40xf32>
    %c2_33 = arith.constant 2 : index
    %c0_34 = arith.constant 0 : index
    %c0_35 = arith.constant 0 : index
    %52 = vector.load %arg3[%c2_33, %c0_34, %c0_35] : memref<7x8x1xf32, #tpu.memory_space<vmem>>, vector<1x8x1xf32>
    %53 = vector.shape_cast %52 : vector<1x8x1xf32> to vector<8x1xf32>
    %54 = vector.broadcast %53 : vector<8x1xf32> to vector<8x40xf32>
    %55 = arith.addf %51, %54 : vector<8x40xf32>
    %c0_36 = arith.constant 0 : index
    %c24_37 = arith.constant 24 : index
    %c0_38 = arith.constant 0 : index
    %56 = vector.load %arg4[%c0_36, %c24_37, %c0_38] : memref<1x64x40xf32, #tpu.memory_space<vmem>>, vector<1x8x40xf32>
    %57 = vector.shape_cast %56 : vector<1x8x40xf32> to vector<8x40xf32>
    %58 = vector.shape_cast %55 : vector<8x40xf32> to vector<1x8x40xf32>
    tpu.vector_store %arg4[%c0_36, %c24_37, %c0_38], %58 {strides = array<i32>} : memref<1x64x40xf32, #tpu.memory_space<vmem>>, vector<1x8x40xf32>,
    %c0_39 = arith.constant 0 : index
    %c32 = arith.constant 32 : index
    %c0_40 = arith.constant 0 : index
    %59 = vector.load %arg1[%c0_39, %c32, %c0_40] : memref<1x64x40xf32, #tpu.memory_space<vmem>>, vector<1x8x40xf32>
    %60 = vector.shape_cast %59 : vector<1x8x40xf32> to vector<8x40xf32>
    %61 = arith.addf %55, %60 : vector<8x40xf32>
    %62 = tpu.concatenate %5, %61, %5 in 1 : vector<8x1xf32>, vector<8x40xf32>, vector<8x1xf32> -> vector<8x42xf32>
    %63 = vector.extract_strided_slice %62 {offsets = [0, 0], sizes = [8, 40], strides = [1, 1]} : vector<8x42xf32> to vector<8x40xf32>
    %64 = vector.extract_strided_slice %62 {offsets = [0, 1], sizes = [8, 40], strides = [1, 1]} : vector<8x42xf32> to vector<8x40xf32>
    %65 = vector.extract_strided_slice %62 {offsets = [0, 2], sizes = [8, 40], strides = [1, 1]} : vector<8x42xf32> to vector<8x40xf32>
    %66 = tpu.concatenate %63, %64, %65 in 0 : vector<8x40xf32>, vector<8x40xf32>, vector<8x40xf32> -> vector<24x40xf32>
    %c3 = arith.constant 3 : index
    %c0_41 = arith.constant 0 : index
    %c0_42 = arith.constant 0 : index
    %67 = vector.load %arg2[%c3, %c0_41, %c0_42] : memref<7x8x24xf32, #tpu.memory_space<vmem>>, vector<1x8x24xf32>
    %68 = vector.shape_cast %67 : vector<1x8x24xf32> to vector<8x24xf32>
    %cst_43 = arith.constant dense<0.000000e+00> : vector<8x40xf32>
    %69 = tpu.matmul %68, %66, %cst_43 {dimension_numbers = #tpu.dot_dimension_numbers<[1], [0], [0], [1], [0, 0, 1, 1], [], []>} : vector<8x24xf32>, vector<24x40xf32>, vector<8x40xf32> -> vector<8x40xf32>
    %c3_44 = arith.constant 3 : index
    %c0_45 = arith.constant 0 : index
    %c0_46 = arith.constant 0 : index
    %70 = vector.load %arg3[%c3_44, %c0_45, %c0_46] : memref<7x8x1xf32, #tpu.memory_space<vmem>>, vector<1x8x1xf32>
    %71 = vector.shape_cast %70 : vector<1x8x1xf32> to vector<8x1xf32>
    %72 = vector.broadcast %71 : vector<8x1xf32> to vector<8x40xf32>
    %73 = arith.addf %69, %72 : vector<8x40xf32>
    %c0_47 = arith.constant 0 : index
    %c32_48 = arith.constant 32 : index
    %c0_49 = arith.constant 0 : index
    %74 = vector.load %arg4[%c0_47, %c32_48, %c0_49] : memref<1x64x40xf32, #tpu.memory_space<vmem>>, vector<1x8x40xf32>
    %75 = vector.shape_cast %74 : vector<1x8x40xf32> to vector<8x40xf32>
    %76 = vector.shape_cast %73 : vector<8x40xf32> to vector<1x8x40xf32>
    tpu.vector_store %arg4[%c0_47, %c32_48, %c0_49], %76 {strides = array<i32>} : memref<1x64x40xf32, #tpu.memory_space<vmem>>, vector<1x8x40xf32>,
    %c0_50 = arith.constant 0 : index
    %c40 = arith.constant 40 : index
    %c0_51 = arith.constant 0 : index
    %77 = vector.load %arg1[%c0_50, %c40, %c0_51] : memref<1x64x40xf32, #tpu.memory_space<vmem>>, vector<1x8x40xf32>
    %78 = vector.shape_cast %77 : vector<1x8x40xf32> to vector<8x40xf32>
    %79 = arith.addf %73, %78 : vector<8x40xf32>
    %80 = tpu.concatenate %5, %79, %5 in 1 : vector<8x1xf32>, vector<8x40xf32>, vector<8x1xf32> -> vector<8x42xf32>
    %81 = vector.extract_strided_slice %80 {offsets = [0, 0], sizes = [8, 40], strides = [1, 1]} : vector<8x42xf32> to vector<8x40xf32>
    %82 = vector.extract_strided_slice %80 {offsets = [0, 1], sizes = [8, 40], strides = [1, 1]} : vector<8x42xf32> to vector<8x40xf32>
    %83 = vector.extract_strided_slice %80 {offsets = [0, 2], sizes = [8, 40], strides = [1, 1]} : vector<8x42xf32> to vector<8x40xf32>
    %84 = tpu.concatenate %81, %82, %83 in 0 : vector<8x40xf32>, vector<8x40xf32>, vector<8x40xf32> -> vector<24x40xf32>
    %c4 = arith.constant 4 : index
    %c0_52 = arith.constant 0 : index
    %c0_53 = arith.constant 0 : index
    %85 = vector.load %arg2[%c4, %c0_52, %c0_53] : memref<7x8x24xf32, #tpu.memory_space<vmem>>, vector<1x8x24xf32>
    %86 = vector.shape_cast %85 : vector<1x8x24xf32> to vector<8x24xf32>
    %cst_54 = arith.constant dense<0.000000e+00> : vector<8x40xf32>
    %87 = tpu.matmul %86, %84, %cst_54 {dimension_numbers = #tpu.dot_dimension_numbers<[1], [0], [0], [1], [0, 0, 1, 1], [], []>} : vector<8x24xf32>, vector<24x40xf32>, vector<8x40xf32> -> vector<8x40xf32>
    %c4_55 = arith.constant 4 : index
    %c0_56 = arith.constant 0 : index
    %c0_57 = arith.constant 0 : index
    %88 = vector.load %arg3[%c4_55, %c0_56, %c0_57] : memref<7x8x1xf32, #tpu.memory_space<vmem>>, vector<1x8x1xf32>
    %89 = vector.shape_cast %88 : vector<1x8x1xf32> to vector<8x1xf32>
    %90 = vector.broadcast %89 : vector<8x1xf32> to vector<8x40xf32>
    %91 = arith.addf %87, %90 : vector<8x40xf32>
    %c0_58 = arith.constant 0 : index
    %c40_59 = arith.constant 40 : index
    %c0_60 = arith.constant 0 : index
    %92 = vector.load %arg4[%c0_58, %c40_59, %c0_60] : memref<1x64x40xf32, #tpu.memory_space<vmem>>, vector<1x8x40xf32>
    %93 = vector.shape_cast %92 : vector<1x8x40xf32> to vector<8x40xf32>
    %94 = vector.shape_cast %91 : vector<8x40xf32> to vector<1x8x40xf32>
    tpu.vector_store %arg4[%c0_58, %c40_59, %c0_60], %94 {strides = array<i32>} : memref<1x64x40xf32, #tpu.memory_space<vmem>>, vector<1x8x40xf32>,
    %c0_61 = arith.constant 0 : index
    %c48 = arith.constant 48 : index
    %c0_62 = arith.constant 0 : index
    %95 = vector.load %arg1[%c0_61, %c48, %c0_62] : memref<1x64x40xf32, #tpu.memory_space<vmem>>, vector<1x8x40xf32>
    %96 = vector.shape_cast %95 : vector<1x8x40xf32> to vector<8x40xf32>
    %97 = arith.addf %91, %96 : vector<8x40xf32>
    %98 = tpu.concatenate %5, %97, %5 in 1 : vector<8x1xf32>, vector<8x40xf32>, vector<8x1xf32> -> vector<8x42xf32>
    %99 = vector.extract_strided_slice %98 {offsets = [0, 0], sizes = [8, 40], strides = [1, 1]} : vector<8x42xf32> to vector<8x40xf32>
    %100 = vector.extract_strided_slice %98 {offsets = [0, 1], sizes = [8, 40], strides = [1, 1]} : vector<8x42xf32> to vector<8x40xf32>
    %101 = vector.extract_strided_slice %98 {offsets = [0, 2], sizes = [8, 40], strides = [1, 1]} : vector<8x42xf32> to vector<8x40xf32>
    %102 = tpu.concatenate %99, %100, %101 in 0 : vector<8x40xf32>, vector<8x40xf32>, vector<8x40xf32> -> vector<24x40xf32>
    %c5 = arith.constant 5 : index
    %c0_63 = arith.constant 0 : index
    %c0_64 = arith.constant 0 : index
    %103 = vector.load %arg2[%c5, %c0_63, %c0_64] : memref<7x8x24xf32, #tpu.memory_space<vmem>>, vector<1x8x24xf32>
    %104 = vector.shape_cast %103 : vector<1x8x24xf32> to vector<8x24xf32>
    %cst_65 = arith.constant dense<0.000000e+00> : vector<8x40xf32>
    %105 = tpu.matmul %104, %102, %cst_65 {dimension_numbers = #tpu.dot_dimension_numbers<[1], [0], [0], [1], [0, 0, 1, 1], [], []>} : vector<8x24xf32>, vector<24x40xf32>, vector<8x40xf32> -> vector<8x40xf32>
    %c5_66 = arith.constant 5 : index
    %c0_67 = arith.constant 0 : index
    %c0_68 = arith.constant 0 : index
    %106 = vector.load %arg3[%c5_66, %c0_67, %c0_68] : memref<7x8x1xf32, #tpu.memory_space<vmem>>, vector<1x8x1xf32>
    %107 = vector.shape_cast %106 : vector<1x8x1xf32> to vector<8x1xf32>
    %108 = vector.broadcast %107 : vector<8x1xf32> to vector<8x40xf32>
    %109 = arith.addf %105, %108 : vector<8x40xf32>
    %c0_69 = arith.constant 0 : index
    %c48_70 = arith.constant 48 : index
    %c0_71 = arith.constant 0 : index
    %110 = vector.load %arg4[%c0_69, %c48_70, %c0_71] : memref<1x64x40xf32, #tpu.memory_space<vmem>>, vector<1x8x40xf32>
    %111 = vector.shape_cast %110 : vector<1x8x40xf32> to vector<8x40xf32>
    %112 = vector.shape_cast %109 : vector<8x40xf32> to vector<1x8x40xf32>
    tpu.vector_store %arg4[%c0_69, %c48_70, %c0_71], %112 {strides = array<i32>} : memref<1x64x40xf32, #tpu.memory_space<vmem>>, vector<1x8x40xf32>,
    %c0_72 = arith.constant 0 : index
    %c56 = arith.constant 56 : index
    %c0_73 = arith.constant 0 : index
    %113 = vector.load %arg1[%c0_72, %c56, %c0_73] : memref<1x64x40xf32, #tpu.memory_space<vmem>>, vector<1x8x40xf32>
    %114 = vector.shape_cast %113 : vector<1x8x40xf32> to vector<8x40xf32>
    %115 = arith.addf %109, %114 : vector<8x40xf32>
    %116 = tpu.concatenate %5, %115, %5 in 1 : vector<8x1xf32>, vector<8x40xf32>, vector<8x1xf32> -> vector<8x42xf32>
    %117 = vector.extract_strided_slice %116 {offsets = [0, 0], sizes = [8, 40], strides = [1, 1]} : vector<8x42xf32> to vector<8x40xf32>
    %118 = vector.extract_strided_slice %116 {offsets = [0, 1], sizes = [8, 40], strides = [1, 1]} : vector<8x42xf32> to vector<8x40xf32>
    %119 = vector.extract_strided_slice %116 {offsets = [0, 2], sizes = [8, 40], strides = [1, 1]} : vector<8x42xf32> to vector<8x40xf32>
    %120 = tpu.concatenate %117, %118, %119 in 0 : vector<8x40xf32>, vector<8x40xf32>, vector<8x40xf32> -> vector<24x40xf32>
    %c6 = arith.constant 6 : index
    %c0_74 = arith.constant 0 : index
    %c0_75 = arith.constant 0 : index
    %121 = vector.load %arg2[%c6, %c0_74, %c0_75] : memref<7x8x24xf32, #tpu.memory_space<vmem>>, vector<1x8x24xf32>
    %122 = vector.shape_cast %121 : vector<1x8x24xf32> to vector<8x24xf32>
    %cst_76 = arith.constant dense<0.000000e+00> : vector<8x40xf32>
    %123 = tpu.matmul %122, %120, %cst_76 {dimension_numbers = #tpu.dot_dimension_numbers<[1], [0], [0], [1], [0, 0, 1, 1], [], []>} : vector<8x24xf32>, vector<24x40xf32>, vector<8x40xf32> -> vector<8x40xf32>
    %c6_77 = arith.constant 6 : index
    %c0_78 = arith.constant 0 : index
    %c0_79 = arith.constant 0 : index
    %124 = vector.load %arg3[%c6_77, %c0_78, %c0_79] : memref<7x8x1xf32, #tpu.memory_space<vmem>>, vector<1x8x1xf32>
    %125 = vector.shape_cast %124 : vector<1x8x1xf32> to vector<8x1xf32>
    %126 = vector.broadcast %125 : vector<8x1xf32> to vector<8x40xf32>
    %127 = arith.addf %123, %126 : vector<8x40xf32>
    %c0_80 = arith.constant 0 : index
    %c56_81 = arith.constant 56 : index
    %c0_82 = arith.constant 0 : index
    %128 = vector.load %arg4[%c0_80, %c56_81, %c0_82] : memref<1x64x40xf32, #tpu.memory_space<vmem>>, vector<1x8x40xf32>
    %129 = vector.shape_cast %128 : vector<1x8x40xf32> to vector<8x40xf32>
    %130 = vector.shape_cast %127 : vector<8x40xf32> to vector<1x8x40xf32>
    tpu.vector_store %arg4[%c0_80, %c56_81, %c0_82], %130 {strides = array<i32>} : memref<1x64x40xf32, #tpu.memory_space<vmem>>, vector<1x8x40xf32>,
    return
  }
  func.func @transform_0(%arg0: i32) -> (i32, i32, i32) {
    %c0_i32 = arith.constant 0 : i32
    %c0_i32_0 = arith.constant 0 : i32
    %c0_i32_1 = arith.constant 0 : i32
    return %arg0, %c0_i32, %c0_i32_0 : i32, i32, i32
  }
  func.func @transform_1(%arg0: i32) -> (i32, i32, i32) {
    %c0_i32 = arith.constant 0 : i32
    %c0_i32_0 = arith.constant 0 : i32
    %c0_i32_1 = arith.constant 0 : i32
    %c0_i32_2 = arith.constant 0 : i32
    return %c0_i32, %c0_i32_0, %c0_i32_1 : i32, i32, i32
  }
  func.func @transform_2(%arg0: i32) -> (i32, i32, i32) {
    %c0_i32 = arith.constant 0 : i32
    %c0_i32_0 = arith.constant 0 : i32
    %c0_i32_1 = arith.constant 0 : i32
    %c0_i32_2 = arith.constant 0 : i32
    return %c0_i32, %c0_i32_0, %c0_i32_1 : i32, i32, i32
  }
  func.func @transform_3(%arg0: i32) -> (i32, i32, i32) {
    %c0_i32 = arith.constant 0 : i32
    %c0_i32_0 = arith.constant 0 : i32
    %c0_i32_1 = arith.constant 0 : i32
    return %arg0, %c0_i32, %c0_i32_0 : i32, i32, i32
  }
}

</mosaic_0001>

<llo_original>
// kernel: tpu_custom_call.1
$region0: #{tpu_custom_call.1}
  #allocation0 [shape = 'u32[]', space=smem, size = 0x4, offset = 0x4, fixed_abs, tag = 'smem constant byte address 0x4 - core index']
  #allocation1 [shape = 'u32[144,128]{1,0:T(1,128)}', space=vmem, size = 0x12000, scoped, tag = 'internal scratch']
  %s0 = inlined_call_operand.vmem [shape: f32[2,64,40], index: 0, kind: input, shape index: {}]
  %s1 = inlined_call_operand.vmem [shape: f32[7,8,24], index: 1, kind: input, shape index: {}]
  %s2 = inlined_call_operand.vmem [shape: f32[7,8,1], index: 2, kind: input, shape index: {}]
  %s3 = inlined_call_operand.vmem [shape: f32[2,64,40], index: 3, kind: output, shape index: {}]
  %s4 = sld [smem:[#allocation0]]
  $region45: #{tpu_custom_call.1} parent=0
    _
  %s6 = ssub.s32 1, %s4
  %s7 = scalar_select 0, %s6, %s4
  loop: start=0, step=1, limit=4
  $region2: #{tpu_custom_call.1} parent=0 // loop_pre_header
    _
  $region3: #{tpu_custom_call.1} parent=0 // loop_header
    %s9 = sphi 0, %s13
    %p10 = scmp.ge.s32.totalorder %s9, 4
    %s19 = sphi 0, %s21
    %s22 = sphi 0, %s19
    %s23 = sphi 0, %s22
    %s39 = sphi 0, %s23
    %s43 = sphi 0, %s43
    %s45 = sphi 0, %s43
    %s46 = sphi 0, %s45
    %s60 = sphi 0, %s46
    %s64 = sphi 0, %s64
    %s66 = sphi 0, %s64
    %s67 = sphi 0, %s66
    %s81 = sphi 0, %s67
    %s87 = sphi 0, %s89
    %s90 = sphi 0, %s87
    %s91 = sphi 0, %s90
    %s107 = sphi 0, %s91
  $region4: #{tpu_custom_call.1} parent=0 // loop_header_branch
    %12 = sbr.rel (%p10) target = $region8
  $region5: #{tpu_custom_call.1} parent=0 // loop_body
    %s14 = ssub.s32 %s9, 1
    %s15 = ssub.s32 %s9, 2
    %s16 = sadd.s32 %s9, 1
    %s17 = ssub.s32 %s9, %s16
    %p18 = scmp.eq.s32.totalorder %s17, 0
    %s20 = sadd.s32 %s19, 1
    %s21 = scalar_select %p18, %s19, %s20
    %p24 = pneg %p18
    %p25 = scmp.eq.s32.totalorder %s9, 1
    %p26 = por %p24, %p25
    %p27 = scmp.ne.s32.totalorder %s19, %s22
    %p28 = scmp.eq.s32.totalorder %s9, 0
    %p29 = por %p27, %p28
    %p30 = scmp.ne.s32.totalorder %s19, %s22
    %p31 = scmp.eq.s32.totalorder %s14, 1
    %p32 = por %p30, %p31
    %p33 = scmp.ne.s32.totalorder %s22, %s23
    %p34 = scmp.eq.s32.totalorder %s14, 0
    %p35 = por %p33, %p34
    %p36 = scmp.ne.s32.totalorder %s22, %s23
    %p37 = scmp.eq.s32.totalorder %s15, 1
    %p38 = por %p36, %p37
    %p40 = scmp.ne.s32.totalorder %s23, %s39
    %p41 = scmp.eq.s32.totalorder %s15, 0
    %p42 = por %p40, %p41
    %s44 = sadd.s32 %s43, 1
    %p47 = scmp.eq.s32.totalorder %s9, 1
    %p48 = scmp.ne.s32.totalorder %s43, %s45
    %p49 = scmp.eq.s32.totalorder %s9, 0
    %p50 = por %p48, %p49
    %p51 = scmp.ne.s32.totalorder %s43, %s45
    %p52 = scmp.eq.s32.totalorder %s14, 1
    %p53 = por %p51, %p52
    %p54 = scmp.ne.s32.totalorder %s45, %s46
    %p55 = scmp.eq.s32.totalorder %s14, 0
    %p56 = por %p54, %p55
    %p57 = scmp.ne.s32.totalorder %s45, %s46
    %p58 = scmp.eq.s32.totalorder %s15, 1
    %p59 = por %p57, %p58
    %p61 = scmp.ne.s32.totalorder %s46, %s60
    %p62 = scmp.eq.s32.totalorder %s15, 0
    %p63 = por %p61, %p62
    %s65 = sadd.s32 %s64, 1
    %p68 = scmp.eq.s32.totalorder %s9, 1
    %p69 = scmp.ne.s32.totalorder %s64, %s66
    %p70 = scmp.eq.s32.totalorder %s9, 0
    %p71 = por %p69, %p70
    %p72 = scmp.ne.s32.totalorder %s64, %s66
    %p73 = scmp.eq.s32.totalorder %s14, 1
    %p74 = por %p72, %p73
    %p75 = scmp.ne.s32.totalorder %s66, %s67
    %p76 = scmp.eq.s32.totalorder %s14, 0
    %p77 = por %p75, %p76
    %p78 = scmp.ne.s32.totalorder %s66, %s67
    %p79 = scmp.eq.s32.totalorder %s15, 1
    %p80 = por %p78, %p79
    %p82 = scmp.ne.s32.totalorder %s67, %s81
    %p83 = scmp.eq.s32.totalorder %s15, 0
    %p84 = por %p82, %p83
    %s85 = ssub.s32 %s9, %s16
    %p86 = scmp.eq.s32.totalorder %s85, 0
    %s88 = sadd.s32 %s87, 1
    %s89 = scalar_select %p86, %s87, %s88
    %p92 = pneg %p86
    %p93 = scmp.eq.s32.totalorder %s9, 1
    %p94 = por %p92, %p93
    %p95 = scmp.ne.s32.totalorder %s87, %s90
    %p96 = scmp.eq.s32.totalorder %s9, 0
    %p97 = por %p95, %p96
    %p98 = scmp.ne.s32.totalorder %s87, %s90
    %p99 = scmp.eq.s32.totalorder %s14, 1
    %p100 = por %p98, %p99
    %p101 = scmp.ne.s32.totalorder %s90, %s91
    %p102 = scmp.eq.s32.totalorder %s14, 0
    %p103 = por %p101, %p102
    %p104 = scmp.ne.s32.totalorder %s90, %s91
    %p105 = scmp.eq.s32.totalorder %s15, 1
    %p106 = por %p104, %p105
    %p108 = scmp.ne.s32.totalorder %s91, %s107
    %p109 = scmp.eq.s32.totalorder %s15, 0
    %p110 = por %p108, %p109
    %p111 = scmp.le.s32.totalorder 1, %s9
    %p112 = scmp.lt.s32.totalorder %s9, 3
    %p113 = pnand %p111, %p112
    %p114 = pneg %p113
    // Predicated region
    $region9: #{tpu_custom_call.1} parent=5 // pred_check
      _
    $region10: #{tpu_custom_call.1} parent=5 // pred_check_branch
      %116 = sbr.rel (%p113) target = $region12
    $region11: #{tpu_custom_call.1} parent=5 // pred_region
      %s117 = ssub.s32 %s9, 1
      // Predicated region
      $region13: #{tpu_custom_call.1} parent=11 // pred_check
        %p118 = pneg %p56
      $region14: #{tpu_custom_call.1} parent=11 // pred_check_branch
        %120 = sbr.rel (%p118) target = $region16
      $region15: #{tpu_custom_call.1} parent=11 // pred_region
        _
      $region16: #{tpu_custom_call.1} parent=11 // pred_fallthru
        _
      // Predicated region
      $region17: #{tpu_custom_call.1} parent=11 // pred_check
        %p121 = pneg %p77
      $region18: #{tpu_custom_call.1} parent=11 // pred_check_branch
        %123 = sbr.rel (%p121) target = $region20
      $region19: #{tpu_custom_call.1} parent=11 // pred_region
        _
      $region20: #{tpu_custom_call.1} parent=11 // pred_fallthru
        _
    $region12: #{tpu_custom_call.1} parent=5 // pred_fallthru
      _
    %p124 = scmp.lt.s32.totalorder %s9, 2
    // Predicated region
    $region21: #{tpu_custom_call.1} parent=5 // pred_check
      %p125 = pneg %p124
    $region22: #{tpu_custom_call.1} parent=5 // pred_check_branch
      %127 = sbr.rel (%p125) target = $region24
    $region23: #{tpu_custom_call.1} parent=5 // pred_region
      // Predicated region
      $region25: #{tpu_custom_call.1} parent=23 // pred_check
        %p128 = pneg %p29
      $region26: #{tpu_custom_call.1} parent=23 // pred_check_branch
        %130 = sbr.rel (%p128) target = $region28
      $region27: #{tpu_custom_call.1} parent=23 // pred_region
        %p131 = scmp.lt.s32.totalorder %s9, 1
        %s132 = scalar_select %p131, %s9, 1
        %s133 = smul.addr %s132, 8
        %s134 = smul.addr %s133, 8
        %s135 = scalar_lea.vmem %s0, %s134
      $region28: #{tpu_custom_call.1} parent=23 // pred_fallthru
        _
    $region24: #{tpu_custom_call.1} parent=5 // pred_fallthru
      _
    %p136 = scmp.le.s32.totalorder 1, %s9
    %p137 = scmp.lt.s32.totalorder %s9, 3
    %p138 = pnand %p136, %p137
    %p139 = pneg %p138
    // Predicated region
    $region29: #{tpu_custom_call.1} parent=5 // pred_check
      _
    $region30: #{tpu_custom_call.1} parent=5 // pred_check_branch
      %141 = sbr.rel (%p138) target = $region32
    $region31: #{tpu_custom_call.1} parent=5 // pred_region
      %s142 = ssub.s32 %s9, 1
      %p143 = scmp.lt.s32.totalorder %s14, 1
      %s144 = scalar_select %p143, %s14, 1
      %s145 = smul.addr %s144, 8
      %s146 = smul.addr %s145, 8
      %s147 = scalar_lea.vmem %s0, %s146
      %p148 = pneg %p35
      %p149 = pneg %p32
      %p150 = pneg %p56
      %p151 = pneg %p53
      %p152 = pneg %p77
      %p153 = pneg %p74
      %p154 = pneg %p103
      %p155 = pneg %p100
      %p156 = scmp.lt.s32.totalorder %s14, 1
      %s157 = scalar_select %p156, %s14, 1
      %s158 = smul.addr %s157, 8
      %s159 = smul.addr %s158, 8
      %s160 = scalar_lea.vmem %s3, %s159
      %p161 = scmp.lt.s32.totalorder %s14, 1
      %s162 = scalar_select %p161, %s14, 1
      %s163 = smul.addr %s162, 8
      %s164 = smul.addr %s163, 8
      %s165 = scalar_lea.vmem %s0, %s164
      %p166 = scmp.lt.s32.totalorder %s14, 1
      %s167 = scalar_select %p166, %s14, 1
      %s168 = smul.addr %s167, 8
      %s169 = smul.addr %s168, 8
      %s170 = scalar_lea.vmem %s3, %s169
      %v171 = vld [vmem:[%s165] sm:$0xff]
      %vm172 = vcmask 326656
      %173 = vst.msk [vmem:[%s170] sm:$0xff] %vm172, %v171
      %v174 = vld [vmem:[%s165 + $0x8] sm:$0xff]
      %176 = vrot.lane.b32.xlu0 %v174, 1
      %v177 = vpop.permute.xlu0 %176
      %vm179 = vcmask 7168
      %v180 = vsel %vm179, 0.0, %v177
      %vm181 = vcmask 334848
      %v182 = vsel %vm181, %v180, 0.0
      %184 = vrot.lane.b32.xlu0 %v182, 127
      %v185 = vpop.permute.xlu0 %184
      %187 = vrot.lane.b32.xlu0 %v182, 126
      %v188 = vpop.permute.xlu0 %187
      %v190 = vld [vmem:[%s1] sm:$0xff]
      %v191 = vld [vmem:[%s2] sm:$0xff]
      %193 = vset.pattern.permute.xlu0 0
      %194 = vperm.xlu0 %193, %v191
      %v195 = vpop.permute.xlu0 %194
      %vm197 = vcmask 195584
      %v199 = vsel %vm197, %v190, 0
      %201 = vmatprep.subr.mxu0 0.0
      %202 = vmatpush1.msra.mxu0 %v182
      %203 = vmatprep.subr.mxu0 0.0
      %204 = vmatpush1.msra.mxu0 %v185
      %205 = vmatprep.subr.mxu0 0.0
      %206 = vmatpush1.msra.mxu0 %v188
      %207 = vmatprep.subr.mxu0 0.0
      %208 = vmatpush1.msra.mxu0 0.0
      %209 = vmatprep.subr.mxu0 0.0
      %210 = vmatpush1.msra.mxu0 0.0
      %211 = vmatprep.subr.mxu0 0.0
      %212 = vmatpush1.msra.mxu0 0.0
      %213 = vmatprep.subr.mxu0 0.0
      %214 = vmatpush1.msra.mxu0 0.0
      %215 = vmatprep.subr.mxu0 0.0
      %216 = vmatpush1.msra.mxu0 0.0
      %217 = vmatprep.subr.mxu0 0.0
      %218 = vmatpush1.msra.mxu0 0.0
      %219 = vmatprep.subr.mxu0 0.0
      %220 = vmatpush1.msra.mxu0 0.0
      %221 = vmatprep.subr.mxu0 0.0
      %222 = vmatpush1.msra.mxu0 0.0
      %223 = vmatprep.subr.mxu0 0.0
      %224 = vmatpush1.msra.mxu0 0.0
      %225 = vmatprep.subr.mxu0 0.0
      %226 = vmatpush1.msra.mxu0 0.0
      %227 = vmatprep.subr.mxu0 0.0
      %228 = vmatpush1.msra.mxu0 0.0
      %229 = vmatprep.subr.mxu0 0.0
      %230 = vmatpush1.msra.mxu0 0.0
      %231 = vmatprep.subr.mxu0 0.0
      %232 = vmatpush1.msra.mxu0 0.0
      %233 = vmatprep.subr.mxu0 0.0
      %234 = vmatpush1.msra.mxu0 0.0
      %235 = vmatprep.subr.mxu0 0.0
      %236 = vmatpush1.msra.mxu0 0.0
      %237 = vmatprep.subr.mxu0 0.0
      %238 = vmatpush1.msra.mxu0 0.0
      %239 = vmatprep.subr.mxu0 0.0
      %240 = vmatpush1.msra.mxu0 0.0
      %241 = vmatprep.subr.mxu0 0.0
      %242 = vmatpush1.msra.mxu0 0.0
      %243 = vmatprep.subr.mxu0 0.0
      %244 = vmatpush1.msra.mxu0 0.0
      %245 = vmatprep.subr.mxu0 0.0
      %246 = vmatpush1.msra.mxu0 0.0
      %247 = vmatprep.subr.mxu0 0.0
      %248 = vmatpush1.msra.mxu0 0.0
      %249 = vmatprep.subr.mxu0 0.0
      %250 = vmatpush1.msra.mxu0 0.0
      %251 = vmatprep.subr.mxu0 0.0
      %252 = vmatpush1.msra.mxu0 0.0
      %253 = vmatprep.subr.mxu0 0.0
      %254 = vmatpush1.msra.mxu0 0.0
      %255 = vmatprep.subr.mxu0 0.0
      %256 = vmatpush1.msra.mxu0 0.0
      %257 = vmatprep.subr.mxu0 0.0
      %258 = vmatpush1.msra.mxu0 0.0
      %259 = vmatprep.subr.mxu0 0.0
      %260 = vmatpush1.msra.mxu0 0.0
      %261 = vmatprep.subr.mxu0 0.0
      %262 = vmatpush1.msra.mxu0 0.0
      %263 = vmatprep.subr.mxu0 0.0
      %264 = vmatpush1.msra.mxu0 0.0
      %265 = vmatprep.mubr.f32.mxu0 0.0
      %266 = vmatmul.mubr.f32.gmra.mrb[0].mxu0 %v199
      %v267 = vpop.f32.mrb[0].mxu0
      %v268 = vadd.f32 %v195, %v267
      %v269 = vpop.f32.mrb[0].mxu0
      %270 = vdwg.mxu0
      %271 = vst.msk [vmem:[%s170 + $0x8] sm:$0xff] %vm172, %v268
      %v272 = vld [vmem:[%s165 + $0x10] sm:$0xff]
      %v273 = vadd.f32 %v268, %v272
      %275 = vrot.lane.b32.xlu0 %v273, 1
      %v276 = vpop.permute.xlu0 %275
      %v278 = vsel %vm179, 0.0, %v276
      %v279 = vsel %vm181, %v278, 0.0
      %281 = vrot.lane.b32.xlu0 %v279, 127
      %v282 = vpop.permute.xlu0 %281
      %284 = vrot.lane.b32.xlu0 %v279, 126
      %v285 = vpop.permute.xlu0 %284
      %s287 = scalar_lea.vmem %s1, 8
      %v288 = vld [vmem:[%s287] sm:$0xff]
      %s289 = scalar_lea.vmem %s2, 8
      %v290 = vld [vmem:[%s289] sm:$0xff]
      %292 = vset.pattern.permute.xlu0 0
      %293 = vperm.xlu0 %292, %v290
      %v294 = vpop.permute.xlu0 %293
      %v297 = vsel %vm197, %v288, 0
      %299 = vmatprep.subr.mxu0 0.0
      %300 = vmatpush1.msra.mxu0 %v279
      %301 = vmatprep.subr.mxu0 0.0
      %302 = vmatpush1.msra.mxu0 %v282
      %303 = vmatprep.subr.mxu0 0.0
      %304 = vmatpush1.msra.mxu0 %v285
      %305 = vmatprep.subr.mxu0 0.0
      %306 = vmatpush1.msra.mxu0 0.0
      %307 = vmatprep.subr.mxu0 0.0
      %308 = vmatpush1.msra.mxu0 0.0
      %309 = vmatprep.subr.mxu0 0.0
      %310 = vmatpush1.msra.mxu0 0.0
      %311 = vmatprep.subr.mxu0 0.0
      %312 = vmatpush1.msra.mxu0 0.0
      %313 = vmatprep.subr.mxu0 0.0
      %314 = vmatpush1.msra.mxu0 0.0
      %315 = vmatprep.subr.mxu0 0.0
      %316 = vmatpush1.msra.mxu0 0.0
      %317 = vmatprep.subr.mxu0 0.0
      %318 = vmatpush1.msra.mxu0 0.0
      %319 = vmatprep.subr.mxu0 0.0
      %320 = vmatpush1.msra.mxu0 0.0
      %321 = vmatprep.subr.mxu0 0.0
      %322 = vmatpush1.msra.mxu0 0.0
      %323 = vmatprep.subr.mxu0 0.0
      %324 = vmatpush1.msra.mxu0 0.0
      %325 = vmatprep.subr.mxu0 0.0
      %326 = vmatpush1.msra.mxu0 0.0
      %327 = vmatprep.subr.mxu0 0.0
      %328 = vmatpush1.msra.mxu0 0.0
      %329 = vmatprep.subr.mxu0 0.0
      %330 = vmatpush1.msra.mxu0 0.0
      %331 = vmatprep.subr.mxu0 0.0
      %332 = vmatpush1.msra.mxu0 0.0
      %333 = vmatprep.subr.mxu0 0.0
      %334 = vmatpush1.msra.mxu0 0.0
      %335 = vmatprep.subr.mxu0 0.0
      %336 = vmatpush1.msra.mxu0 0.0
      %337 = vmatprep.subr.mxu0 0.0
      %338 = vmatpush1.msra.mxu0 0.0
      %339 = vmatprep.subr.mxu0 0.0
      %340 = vmatpush1.msra.mxu0 0.0
      %341 = vmatprep.subr.mxu0 0.0
      %342 = vmatpush1.msra.mxu0 0.0
      %343 = vmatprep.subr.mxu0 0.0
      %344 = vmatpush1.msra.mxu0 0.0
      %345 = vmatprep.subr.mxu0 0.0
      %346 = vmatpush1.msra.mxu0 0.0
      %347 = vmatprep.subr.mxu0 0.0
      %348 = vmatpush1.msra.mxu0 0.0
      %349 = vmatprep.subr.mxu0 0.0
      %350 = vmatpush1.msra.mxu0 0.0
      %351 = vmatprep.subr.mxu0 0.0
      %352 = vmatpush1.msra.mxu0 0.0
      %353 = vmatprep.subr.mxu0 0.0
      %354 = vmatpush1.msra.mxu0 0.0
      %355 = vmatprep.subr.mxu0 0.0
      %356 = vmatpush1.msra.mxu0 0.0
      %357 = vmatprep.subr.mxu0 0.0
      %358 = vmatpush1.msra.mxu0 0.0
      %359 = vmatprep.subr.mxu0 0.0
      %360 = vmatpush1.msra.mxu0 0.0
      %361 = vmatprep.subr.mxu0 0.0
      %362 = vmatpush1.msra.mxu0 0.0
      %363 = vmatprep.mubr.f32.mxu0 0.0
      %364 = vmatmul.mubr.f32.gmra.mrb[0].mxu0 %v297
      %v365 = vpop.f32.mrb[0].mxu0
      %v366 = vadd.f32 %v294, %v365
      %v367 = vpop.f32.mrb[0].mxu0
      %368 = vdwg.mxu0
      %369 = vst.msk [vmem:[%s170 + $0x10] sm:$0xff] %vm172, %v366
      %v370 = vld [vmem:[%s165 + $0x18] sm:$0xff]
      %v371 = vadd.f32 %v366, %v370
      %373 = vrot.lane.b32.xlu0 %v371, 1
      %v374 = vpop.permute.xlu0 %373
      %v376 = vsel %vm179, 0.0, %v374
      %v377 = vsel %vm181, %v376, 0.0
      %379 = vrot.lane.b32.xlu0 %v377, 127
      %v380 = vpop.permute.xlu0 %379
      %382 = vrot.lane.b32.xlu0 %v377, 126
      %v383 = vpop.permute.xlu0 %382
      %s385 = scalar_lea.vmem %s1, 16
      %v386 = vld [vmem:[%s385] sm:$0xff]
      %s387 = scalar_lea.vmem %s2, 16
      %v388 = vld [vmem:[%s387] sm:$0xff]
      %390 = vset.pattern.permute.xlu0 0
      %391 = vperm.xlu0 %390, %v388
      %v392 = vpop.permute.xlu0 %391
      %v395 = vsel %vm197, %v386, 0
      %397 = vmatprep.subr.mxu0 0.0
      %398 = vmatpush1.msra.mxu0 %v377
      %399 = vmatprep.subr.mxu0 0.0
      %400 = vmatpush1.msra.mxu0 %v380
      %401 = vmatprep.subr.mxu0 0.0
      %402 = vmatpush1.msra.mxu0 %v383
      %403 = vmatprep.subr.mxu0 0.0
      %404 = vmatpush1.msra.mxu0 0.0
      %405 = vmatprep.subr.mxu0 0.0
      %406 = vmatpush1.msra.mxu0 0.0
      %407 = vmatprep.subr.mxu0 0.0
      %408 = vmatpush1.msra.mxu0 0.0
      %409 = vmatprep.subr.mxu0 0.0
      %410 = vmatpush1.msra.mxu0 0.0
      %411 = vmatprep.subr.mxu0 0.0
      %412 = vmatpush1.msra.mxu0 0.0
      %413 = vmatprep.subr.mxu0 0.0
      %414 = vmatpush1.msra.mxu0 0.0
      %415 = vmatprep.subr.mxu0 0.0
      %416 = vmatpush1.msra.mxu0 0.0
      %417 = vmatprep.subr.mxu0 0.0
      %418 = vmatpush1.msra.mxu0 0.0
      %419 = vmatprep.subr.mxu0 0.0
      %420 = vmatpush1.msra.mxu0 0.0
      %421 = vmatprep.subr.mxu0 0.0
      %422 = vmatpush1.msra.mxu0 0.0
      %423 = vmatprep.subr.mxu0 0.0
      %424 = vmatpush1.msra.mxu0 0.0
      %425 = vmatprep.subr.mxu0 0.0
      %426 = vmatpush1.msra.mxu0 0.0
      %427 = vmatprep.subr.mxu0 0.0
      %428 = vmatpush1.msra.mxu0 0.0
      %429 = vmatprep.subr.mxu0 0.0
      %430 = vmatpush1.msra.mxu0 0.0
      %431 = vmatprep.subr.mxu0 0.0
      %432 = vmatpush1.msra.mxu0 0.0
      %433 = vmatprep.subr.mxu0 0.0
      %434 = vmatpush1.msra.mxu0 0.0
      %435 = vmatprep.subr.mxu0 0.0
      %436 = vmatpush1.msra.mxu0 0.0
      %437 = vmatprep.subr.mxu0 0.0
      %438 = vmatpush1.msra.mxu0 0.0
      %439 = vmatprep.subr.mxu0 0.0
      %440 = vmatpush1.msra.mxu0 0.0
      %441 = vmatprep.subr.mxu0 0.0
      %442 = vmatpush1.msra.mxu0 0.0
      %443 = vmatprep.subr.mxu0 0.0
      %444 = vmatpush1.msra.mxu0 0.0
      %445 = vmatprep.subr.mxu0 0.0
      %446 = vmatpush1.msra.mxu0 0.0
      %447 = vmatprep.subr.mxu0 0.0
      %448 = vmatpush1.msra.mxu0 0.0
      %449 = vmatprep.subr.mxu0 0.0
      %450 = vmatpush1.msra.mxu0 0.0
      %451 = vmatprep.subr.mxu0 0.0
      %452 = vmatpush1.msra.mxu0 0.0
      %453 = vmatprep.subr.mxu0 0.0
      %454 = vmatpush1.msra.mxu0 0.0
      %455 = vmatprep.subr.mxu0 0.0
      %456 = vmatpush1.msra.mxu0 0.0
      %457 = vmatprep.subr.mxu0 0.0
      %458 = vmatpush1.msra.mxu0 0.0
      %459 = vmatprep.subr.mxu0 0.0
      %460 = vmatpush1.msra.mxu0 0.0
      %461 = vmatprep.mubr.f32.mxu0 0.0
      %462 = vmatmul.mubr.f32.gmra.mrb[0].mxu0 %v395
      %v463 = vpop.f32.mrb[0].mxu0
      %v464 = vadd.f32 %v392, %v463
      %v465 = vpop.f32.mrb[0].mxu0
      %466 = vdwg.mxu0
      %467 = vst.msk [vmem:[%s170 + $0x18] sm:$0xff] %vm172, %v464
      %v468 = vld [vmem:[%s165 + $0x20] sm:$0xff]
      %v469 = vadd.f32 %v464, %v468
      %471 = vrot.lane.b32.xlu0 %v469, 1
      %v472 = vpop.permute.xlu0 %471
      %v474 = vsel %vm179, 0.0, %v472
      %v475 = vsel %vm181, %v474, 0.0
      %477 = vrot.lane.b32.xlu0 %v475, 127
      %v478 = vpop.permute.xlu0 %477
      %480 = vrot.lane.b32.xlu0 %v475, 126
      %v481 = vpop.permute.xlu0 %480
      %s483 = scalar_lea.vmem %s1, 24
      %v484 = vld [vmem:[%s483] sm:$0xff]
      %s485 = scalar_lea.vmem %s2, 24
      %v486 = vld [vmem:[%s485] sm:$0xff]
      %488 = vset.pattern.permute.xlu0 0
      %489 = vperm.xlu0 %488, %v486
      %v490 = vpop.permute.xlu0 %489
      %v493 = vsel %vm197, %v484, 0
      %495 = vmatprep.subr.mxu0 0.0
      %496 = vmatpush1.msra.mxu0 %v475
      %497 = vmatprep.subr.mxu0 0.0
      %498 = vmatpush1.msra.mxu0 %v478
      %499 = vmatprep.subr.mxu0 0.0
      %500 = vmatpush1.msra.mxu0 %v481
      %501 = vmatprep.subr.mxu0 0.0
      %502 = vmatpush1.msra.mxu0 0.0
      %503 = vmatprep.subr.mxu0 0.0
      %504 = vmatpush1.msra.mxu0 0.0
      %505 = vmatprep.subr.mxu0 0.0
      %506 = vmatpush1.msra.mxu0 0.0
      %507 = vmatprep.subr.mxu0 0.0
      %508 = vmatpush1.msra.mxu0 0.0
      %509 = vmatprep.subr.mxu0 0.0
      %510 = vmatpush1.msra.mxu0 0.0
      %511 = vmatprep.subr.mxu0 0.0
      %512 = vmatpush1.msra.mxu0 0.0
      %513 = vmatprep.subr.mxu0 0.0
      %514 = vmatpush1.msra.mxu0 0.0
      %515 = vmatprep.subr.mxu0 0.0
      %516 = vmatpush1.msra.mxu0 0.0
      %517 = vmatprep.subr.mxu0 0.0
      %518 = vmatpush1.msra.mxu0 0.0
      %519 = vmatprep.subr.mxu0 0.0
      %520 = vmatpush1.msra.mxu0 0.0
      %521 = vmatprep.subr.mxu0 0.0
      %522 = vmatpush1.msra.mxu0 0.0
      %523 = vmatprep.subr.mxu0 0.0
      %524 = vmatpush1.msra.mxu0 0.0
      %525 = vmatprep.subr.mxu0 0.0
      %526 = vmatpush1.msra.mxu0 0.0
      %527 = vmatprep.subr.mxu0 0.0
      %528 = vmatpush1.msra.mxu0 0.0
      %529 = vmatprep.subr.mxu0 0.0
      %530 = vmatpush1.msra.mxu0 0.0
      %531 = vmatprep.subr.mxu0 0.0
      %532 = vmatpush1.msra.mxu0 0.0
      %533 = vmatprep.subr.mxu0 0.0
      %534 = vmatpush1.msra.mxu0 0.0
      %535 = vmatprep.subr.mxu0 0.0
      %536 = vmatpush1.msra.mxu0 0.0
      %537 = vmatprep.subr.mxu0 0.0
      %538 = vmatpush1.msra.mxu0 0.0
      %539 = vmatprep.subr.mxu0 0.0
      %540 = vmatpush1.msra.mxu0 0.0
      %541 = vmatprep.subr.mxu0 0.0
      %542 = vmatpush1.msra.mxu0 0.0
      %543 = vmatprep.subr.mxu0 0.0
      %544 = vmatpush1.msra.mxu0 0.0
      %545 = vmatprep.subr.mxu0 0.0
      %546 = vmatpush1.msra.mxu0 0.0
      %547 = vmatprep.subr.mxu0 0.0
      %548 = vmatpush1.msra.mxu0 0.0
      %549 = vmatprep.subr.mxu0 0.0
      %550 = vmatpush1.msra.mxu0 0.0
      %551 = vmatprep.subr.mxu0 0.0
      %552 = vmatpush1.msra.mxu0 0.0
      %553 = vmatprep.subr.mxu0 0.0
      %554 = vmatpush1.msra.mxu0 0.0
      %555 = vmatprep.subr.mxu0 0.0
      %556 = vmatpush1.msra.mxu0 0.0
      %557 = vmatprep.subr.mxu0 0.0
      %558 = vmatpush1.msra.mxu0 0.0
      %559 = vmatprep.mubr.f32.mxu0 0.0
      %560 = vmatmul.mubr.f32.gmra.mrb[0].mxu0 %v493
      %v561 = vpop.f32.mrb[0].mxu0
      %v562 = vadd.f32 %v490, %v561
      %v563 = vpop.f32.mrb[0].mxu0
      %564 = vdwg.mxu0
      %565 = vst.msk [vmem:[%s170 + $0x20] sm:$0xff] %vm172, %v562
      %v566 = vld [vmem:[%s165 + $0x28] sm:$0xff]
      %v567 = vadd.f32 %v562, %v566
      %569 = vrot.lane.b32.xlu0 %v567, 1
      %v570 = vpop.permute.xlu0 %569
      %v572 = vsel %vm179, 0.0, %v570
      %v573 = vsel %vm181, %v572, 0.0
      %575 = vrot.lane.b32.xlu0 %v573, 127
      %v576 = vpop.permute.xlu0 %575
      %578 = vrot.lane.b32.xlu0 %v573, 126
      %v579 = vpop.permute.xlu0 %578
      %s581 = scalar_lea.vmem %s1, 32
      %v582 = vld [vmem:[%s581] sm:$0xff]
      %s583 = scalar_lea.vmem %s2, 32
      %v584 = vld [vmem:[%s583] sm:$0xff]
      %586 = vset.pattern.permute.xlu0 0
      %587 = vperm.xlu0 %586, %v584
      %v588 = vpop.permute.xlu0 %587
      %v591 = vsel %vm197, %v582, 0
      %593 = vmatprep.subr.mxu0 0.0
      %594 = vmatpush1.msra.mxu0 %v573
      %595 = vmatprep.subr.mxu0 0.0
      %596 = vmatpush1.msra.mxu0 %v576
      %597 = vmatprep.subr.mxu0 0.0
      %598 = vmatpush1.msra.mxu0 %v579
      %599 = vmatprep.subr.mxu0 0.0
      %600 = vmatpush1.msra.mxu0 0.0
      %601 = vmatprep.subr.mxu0 0.0
      %602 = vmatpush1.msra.mxu0 0.0
      %603 = vmatprep.subr.mxu0 0.0
      %604 = vmatpush1.msra.mxu0 0.0
      %605 = vmatprep.subr.mxu0 0.0
      %606 = vmatpush1.msra.mxu0 0.0
      %607 = vmatprep.subr.mxu0 0.0
      %608 = vmatpush1.msra.mxu0 0.0
      %609 = vmatprep.subr.mxu0 0.0
      %610 = vmatpush1.msra.mxu0 0.0
      %611 = vmatprep.subr.mxu0 0.0
      %612 = vmatpush1.msra.mxu0 0.0
      %613 = vmatprep.subr.mxu0 0.0
      %614 = vmatpush1.msra.mxu0 0.0
      %615 = vmatprep.subr.mxu0 0.0
      %616 = vmatpush1.msra.mxu0 0.0
      %617 = vmatprep.subr.mxu0 0.0
      %618 = vmatpush1.msra.mxu0 0.0
      %619 = vmatprep.subr.mxu0 0.0
      %620 = vmatpush1.msra.mxu0 0.0
      %621 = vmatprep.subr.mxu0 0.0
      %622 = vmatpush1.msra.mxu0 0.0
      %623 = vmatprep.subr.mxu0 0.0
      %624 = vmatpush1.msra.mxu0 0.0
      %625 = vmatprep.subr.mxu0 0.0
      %626 = vmatpush1.msra.mxu0 0.0
      %627 = vmatprep.subr.mxu0 0.0
      %628 = vmatpush1.msra.mxu0 0.0
      %629 = vmatprep.subr.mxu0 0.0
      %630 = vmatpush1.msra.mxu0 0.0
      %631 = vmatprep.subr.mxu0 0.0
      %632 = vmatpush1.msra.mxu0 0.0
      %633 = vmatprep.subr.mxu0 0.0
      %634 = vmatpush1.msra.mxu0 0.0
      %635 = vmatprep.subr.mxu0 0.0
      %636 = vmatpush1.msra.mxu0 0.0
      %637 = vmatprep.subr.mxu0 0.0
      %638 = vmatpush1.msra.mxu0 0.0
      %639 = vmatprep.subr.mxu0 0.0
      %640 = vmatpush1.msra.mxu0 0.0
      %641 = vmatprep.subr.mxu0 0.0
      %642 = vmatpush1.msra.mxu0 0.0
      %643 = vmatprep.subr.mxu0 0.0
      %644 = vmatpush1.msra.mxu0 0.0
      %645 = vmatprep.subr.mxu0 0.0
      %646 = vmatpush1.msra.mxu0 0.0
      %647 = vmatprep.subr.mxu0 0.0
      %648 = vmatpush1.msra.mxu0 0.0
      %649 = vmatprep.subr.mxu0 0.0
      %650 = vmatpush1.msra.mxu0 0.0
      %651 = vmatprep.subr.mxu0 0.0
      %652 = vmatpush1.msra.mxu0 0.0
      %653 = vmatprep.subr.mxu0 0.0
      %654 = vmatpush1.msra.mxu0 0.0
      %655 = vmatprep.subr.mxu0 0.0
      %656 = vmatpush1.msra.mxu0 0.0
      %657 = vmatprep.mubr.f32.mxu0 0.0
      %658 = vmatmul.mubr.f32.gmra.mrb[0].mxu0 %v591
      %v659 = vpop.f32.mrb[0].mxu0
      %v660 = vadd.f32 %v588, %v659
      %v661 = vpop.f32.mrb[0].mxu0
      %662 = vdwg.mxu0
      %663 = vst.msk [vmem:[%s170 + $0x28] sm:$0xff] %vm172, %v660
      %v664 = vld [vmem:[%s165 + $0x30] sm:$0xff]
      %v665 = vadd.f32 %v660, %v664
      %667 = vrot.lane.b32.xlu0 %v665, 1
      %v668 = vpop.permute.xlu0 %667
      %v670 = vsel %vm179, 0.0, %v668
      %v671 = vsel %vm181, %v670, 0.0
      %673 = vrot.lane.b32.xlu0 %v671, 127
      %v674 = vpop.permute.xlu0 %673
      %676 = vrot.lane.b32.xlu0 %v671, 126
      %v677 = vpop.permute.xlu0 %676
      %s679 = scalar_lea.vmem %s1, 40
      %v680 = vld [vmem:[%s679] sm:$0xff]
      %s681 = scalar_lea.vmem %s2, 40
      %v682 = vld [vmem:[%s681] sm:$0xff]
      %684 = vset.pattern.permute.xlu0 0
      %685 = vperm.xlu0 %684, %v682
      %v686 = vpop.permute.xlu0 %685
      %v689 = vsel %vm197, %v680, 0
      %691 = vmatprep.subr.mxu0 0.0
      %692 = vmatpush1.msra.mxu0 %v671
      %693 = vmatprep.subr.mxu0 0.0
      %694 = vmatpush1.msra.mxu0 %v674
      %695 = vmatprep.subr.mxu0 0.0
      %696 = vmatpush1.msra.mxu0 %v677
      %697 = vmatprep.subr.mxu0 0.0
      %698 = vmatpush1.msra.mxu0 0.0
      %699 = vmatprep.subr.mxu0 0.0
      %700 = vmatpush1.msra.mxu0 0.0
      %701 = vmatprep.subr.mxu0 0.0
      %702 = vmatpush1.msra.mxu0 0.0
      %703 = vmatprep.subr.mxu0 0.0
      %704 = vmatpush1.msra.mxu0 0.0
      %705 = vmatprep.subr.mxu0 0.0
      %706 = vmatpush1.msra.mxu0 0.0
      %707 = vmatprep.subr.mxu0 0.0
      %708 = vmatpush1.msra.mxu0 0.0
      %709 = vmatprep.subr.mxu0 0.0
      %710 = vmatpush1.msra.mxu0 0.0
      %711 = vmatprep.subr.mxu0 0.0
      %712 = vmatpush1.msra.mxu0 0.0
      %713 = vmatprep.subr.mxu0 0.0
      %714 = vmatpush1.msra.mxu0 0.0
      %715 = vmatprep.subr.mxu0 0.0
      %716 = vmatpush1.msra.mxu0 0.0
      %717 = vmatprep.subr.mxu0 0.0
      %718 = vmatpush1.msra.mxu0 0.0
      %719 = vmatprep.subr.mxu0 0.0
      %720 = vmatpush1.msra.mxu0 0.0
      %721 = vmatprep.subr.mxu0 0.0
      %722 = vmatpush1.msra.mxu0 0.0
      %723 = vmatprep.subr.mxu0 0.0
      %724 = vmatpush1.msra.mxu0 0.0
      %725 = vmatprep.subr.mxu0 0.0
      %726 = vmatpush1.msra.mxu0 0.0
      %727 = vmatprep.subr.mxu0 0.0
      %728 = vmatpush1.msra.mxu0 0.0
      %729 = vmatprep.subr.mxu0 0.0
      %730 = vmatpush1.msra.mxu0 0.0
      %731 = vmatprep.subr.mxu0 0.0
      %732 = vmatpush1.msra.mxu0 0.0
      %733 = vmatprep.subr.mxu0 0.0
      %734 = vmatpush1.msra.mxu0 0.0
      %735 = vmatprep.subr.mxu0 0.0
      %736 = vmatpush1.msra.mxu0 0.0
      %737 = vmatprep.subr.mxu0 0.0
      %738 = vmatpush1.msra.mxu0 0.0
      %739 = vmatprep.subr.mxu0 0.0
      %740 = vmatpush1.msra.mxu0 0.0
      %741 = vmatprep.subr.mxu0 0.0
      %742 = vmatpush1.msra.mxu0 0.0
      %743 = vmatprep.subr.mxu0 0.0
      %744 = vmatpush1.msra.mxu0 0.0
      %745 = vmatprep.subr.mxu0 0.0
      %746 = vmatpush1.msra.mxu0 0.0
      %747 = vmatprep.subr.mxu0 0.0
      %748 = vmatpush1.msra.mxu0 0.0
      %749 = vmatprep.subr.mxu0 0.0
      %750 = vmatpush1.msra.mxu0 0.0
      %751 = vmatprep.subr.mxu0 0.0
      %752 = vmatpush1.msra.mxu0 0.0
      %753 = vmatprep.subr.mxu0 0.0
      %754 = vmatpush1.msra.mxu0 0.0
      %755 = vmatprep.mubr.f32.mxu0 0.0
      %756 = vmatmul.mubr.f32.gmra.mrb[0].mxu0 %v689
      %v757 = vpop.f32.mrb[0].mxu0
      %v758 = vadd.f32 %v686, %v757
      %v759 = vpop.f32.mrb[0].mxu0
      %760 = vdwg.mxu0
      %761 = vst.msk [vmem:[%s170 + $0x30] sm:$0xff] %vm172, %v758
      %v762 = vld [vmem:[%s165 + $0x38] sm:$0xff]
      %v763 = vadd.f32 %v758, %v762
      %765 = vrot.lane.b32.xlu0 %v763, 1
      %v766 = vpop.permute.xlu0 %765
      %v768 = vsel %vm179, 0.0, %v766
      %v769 = vsel %vm181, %v768, 0.0
      %771 = vrot.lane.b32.xlu0 %v769, 127
      %v772 = vpop.permute.xlu0 %771
      %774 = vrot.lane.b32.xlu0 %v769, 126
      %v775 = vpop.permute.xlu0 %774
      %s777 = scalar_lea.vmem %s1, 48
      %v778 = vld [vmem:[%s777] sm:$0xff]
      %s779 = scalar_lea.vmem %s2, 48
      %v780 = vld [vmem:[%s779] sm:$0xff]
      %782 = vset.pattern.permute.xlu0 0
      %783 = vperm.xlu0 %782, %v780
      %v784 = vpop.permute.xlu0 %783
      %v787 = vsel %vm197, %v778, 0
      %789 = vmatprep.subr.mxu0 0.0
      %790 = vmatpush1.msra.mxu0 %v769
      %791 = vmatprep.subr.mxu0 0.0
      %792 = vmatpush1.msra.mxu0 %v772
      %793 = vmatprep.subr.mxu0 0.0
      %794 = vmatpush1.msra.mxu0 %v775
      %795 = vmatprep.subr.mxu0 0.0
      %796 = vmatpush1.msra.mxu0 0.0
      %797 = vmatprep.subr.mxu0 0.0
      %798 = vmatpush1.msra.mxu0 0.0
      %799 = vmatprep.subr.mxu0 0.0
      %800 = vmatpush1.msra.mxu0 0.0
      %801 = vmatprep.subr.mxu0 0.0
      %802 = vmatpush1.msra.mxu0 0.0
      %803 = vmatprep.subr.mxu0 0.0
      %804 = vmatpush1.msra.mxu0 0.0
      %805 = vmatprep.subr.mxu0 0.0
      %806 = vmatpush1.msra.mxu0 0.0
      %807 = vmatprep.subr.mxu0 0.0
      %808 = vmatpush1.msra.mxu0 0.0
      %809 = vmatprep.subr.mxu0 0.0
      %810 = vmatpush1.msra.mxu0 0.0
      %811 = vmatprep.subr.mxu0 0.0
      %812 = vmatpush1.msra.mxu0 0.0
      %813 = vmatprep.subr.mxu0 0.0
      %814 = vmatpush1.msra.mxu0 0.0
      %815 = vmatprep.subr.mxu0 0.0
      %816 = vmatpush1.msra.mxu0 0.0
      %817 = vmatprep.subr.mxu0 0.0
      %818 = vmatpush1.msra.mxu0 0.0
      %819 = vmatprep.subr.mxu0 0.0
      %820 = vmatpush1.msra.mxu0 0.0
      %821 = vmatprep.subr.mxu0 0.0
      %822 = vmatpush1.msra.mxu0 0.0
      %823 = vmatprep.subr.mxu0 0.0
      %824 = vmatpush1.msra.mxu0 0.0
      %825 = vmatprep.subr.mxu0 0.0
      %826 = vmatpush1.msra.mxu0 0.0
      %827 = vmatprep.subr.mxu0 0.0
      %828 = vmatpush1.msra.mxu0 0.0
      %829 = vmatprep.subr.mxu0 0.0
      %830 = vmatpush1.msra.mxu0 0.0
      %831 = vmatprep.subr.mxu0 0.0
      %832 = vmatpush1.msra.mxu0 0.0
      %833 = vmatprep.subr.mxu0 0.0
      %834 = vmatpush1.msra.mxu0 0.0
      %835 = vmatprep.subr.mxu0 0.0
      %836 = vmatpush1.msra.mxu0 0.0
      %837 = vmatprep.subr.mxu0 0.0
      %838 = vmatpush1.msra.mxu0 0.0
      %839 = vmatprep.subr.mxu0 0.0
      %840 = vmatpush1.msra.mxu0 0.0
      %841 = vmatprep.subr.mxu0 0.0
      %842 = vmatpush1.msra.mxu0 0.0
      %843 = vmatprep.subr.mxu0 0.0
      %844 = vmatpush1.msra.mxu0 0.0
      %845 = vmatprep.subr.mxu0 0.0
      %846 = vmatpush1.msra.mxu0 0.0
      %847 = vmatprep.subr.mxu0 0.0
      %848 = vmatpush1.msra.mxu0 0.0
      %849 = vmatprep.subr.mxu0 0.0
      %850 = vmatpush1.msra.mxu0 0.0
      %851 = vmatprep.subr.mxu0 0.0
      %852 = vmatpush1.msra.mxu0 0.0
      %853 = vmatprep.mubr.f32.mxu0 0.0
      %854 = vmatmul.mubr.f32.gmra.mrb[0].mxu0 %v787
      %v855 = vpop.f32.mrb[0].mxu0
      %v856 = vadd.f32 %v784, %v855
      %v857 = vpop.f32.mrb[0].mxu0
      %858 = vdwg.mxu0
      %859 = vst.msk [vmem:[%s170 + $0x38] sm:$0xff] %vm172, %v856
      %p860 = scmp.lt.s32.totalorder %s14, 1
      %s861 = scalar_select %p860, %s14, 1
      %s862 = smul.addr %s861, 8
      %s863 = smul.addr %s862, 8
      %s864 = scalar_lea.vmem %s3, %s863
      // Predicated region
      $region33: #{tpu_custom_call.1} parent=31 // pred_check
        %p865 = pneg %p100
      $region34: #{tpu_custom_call.1} parent=31 // pred_check_branch
        %867 = sbr.rel (%p865) target = $region36
      $region35: #{tpu_custom_call.1} parent=31 // pred_region
        _
      $region36: #{tpu_custom_call.1} parent=31 // pred_fallthru
        _
    $region32: #{tpu_custom_call.1} parent=5 // pred_fallthru
      _
    %p868 = scmp.le.s32.totalorder 2, %s9
    // Predicated region
    $region37: #{tpu_custom_call.1} parent=5 // pred_check
      %p869 = pneg %p868
    $region38: #{tpu_custom_call.1} parent=5 // pred_check_branch
      %871 = sbr.rel (%p869) target = $region40
    $region39: #{tpu_custom_call.1} parent=5 // pred_region
      %s872 = ssub.s32 %s9, 2
      // Predicated region
      $region41: #{tpu_custom_call.1} parent=39 // pred_check
        %p873 = pneg %p106
      $region42: #{tpu_custom_call.1} parent=39 // pred_check_branch
        %875 = sbr.rel (%p873) target = $region44
      $region43: #{tpu_custom_call.1} parent=39 // pred_region
        %p876 = scmp.lt.s32.totalorder %s15, 1
        %s877 = scalar_select %p876, %s15, 1
        %s878 = smul.addr %s877, 8
        %s879 = smul.addr %s878, 8
        %s880 = scalar_lea.vmem %s3, %s879
      $region44: #{tpu_custom_call.1} parent=39 // pred_fallthru
        _
    $region40: #{tpu_custom_call.1} parent=5 // pred_fallthru
      _
  $region6: #{tpu_custom_call.1} parent=0 // loop_footer
    %s13 = sadd.s32 1, %s9
  $region7: #{tpu_custom_call.1} parent=0 // loop_footer_branch
    %8 = sbr.rel target = $region3
  $region8: #{tpu_custom_call.1} parent=0 // loop_exit
    _

</llo_original>
